<compile_context>
chip_gen: v7x
topology: tpu7x:2x2x1
jax: 0.10.0
libtpu: 0.0.40
codegen_flags: <defaults>
</compile_context>

<pallas_src>
import jax
import jax.numpy as jnp
from jax import lax
from jax.experimental import pallas as pl
from jax.experimental.pallas import tpu as pltpu


def hsv_feature_kernel(img_ref, hsv_ref):
    # img_ref / hsv_ref: (Bt, 3, S, 128) — last two dims are (sublane, lane) dense,
    # S is a multiple of 8 so every vreg tile is full and stores are unmasked.
    x = img_ref[...].astype(jnp.float32)     # upcast so norms are accurate for bf16 inputs
    r = x[:, 0]                              # (Bt, S, 128) — leading-dim selects, no relayout
    g = x[:, 1]
    b = x[:, 2]

    mx = jnp.maximum(jnp.maximum(r, g), b)
    mn = jnp.minimum(jnp.minimum(r, g), b)
    diff = mx - mn
    v = mx

    tiny = jnp.float32(1e-30)

    # Saturation: diff / mx.  When mx == 0 (black / zero-pad pixels) diff == 0,
    # so diff * (1/tiny) is exactly 0 — no extra select needed.
    inv_mx = pl.reciprocal(jnp.maximum(mx, tiny))
    s = diff * inv_mx

    # Hue: one shared reciprocal; fmod(., 6) of an argument in [-1, 1] is a single
    # compare+select.  Later branches overwrite earlier ones (matches the
    # sequential masked writes in the PyTorch reference); a single diff>0 mask
    # zeroes the degenerate pixels at the end.
    inv_diff = pl.reciprocal(jnp.maximum(diff, tiny))
    t = (g - b) * inv_diff
    t = jnp.where(t < 0, t + 6.0, t)                    # == mod(t, 6) for t in [-1, 1]
    h = jnp.where(mx == r, t, 0.0)
    h = jnp.where(mx == g, (b - r) * inv_diff + 2.0, h)
    h = jnp.where(mx == b, (r - g) * inv_diff + 4.0, h)
    h = jnp.where(diff > 0, h, 0.0)
    # NOTE: the reference's `h / 6` is intentionally dropped — it cancels under
    # the per-channel L2 normalization below.

    # F.normalize over flattened spatial dims: x / max(||x||, 1e-12)
    # == x * rsqrt(max(sum(x^2), 1e-24)).  Pad lanes are exact zeros.
    eps2 = jnp.float32(1e-24)
    inv_nh = lax.rsqrt(jnp.maximum(jnp.sum(h * h, axis=(-2, -1), keepdims=True), eps2))
    inv_ns = lax.rsqrt(jnp.maximum(jnp.sum(s * s, axis=(-2, -1), keepdims=True), eps2))
    inv_nv = lax.rsqrt(jnp.maximum(jnp.sum(v * v, axis=(-2, -1), keepdims=True), eps2))

    od = hsv_ref.dtype
    hsv_ref[:, 0, :, :] = (h * inv_nh).astype(od)
    hsv_ref[:, 1, :, :] = (s * inv_ns).astype(od)
    hsv_ref[:, 2, :, :] = (v * inv_nv).astype(od)


def _detect_vmem_capacity_bytes():
    """Best-effort per-core VMEM capacity; None if it cannot be determined."""
    try:
        info = pltpu.get_tpu_info()
    except Exception:
        return None
    for name in ("vmem_capacity_bytes", "vmem_size_bytes", "vmem_bytes"):
        val = getattr(info, name, None)
        if isinstance(val, int) and val > 0:
            return val
    return None


def augmented_feature_extractor(image: jax.Array):
    """Eval-mode forward of AugmentedFeatureExtractor(method='hsv', normalize=True)."""
    B, C, H, W = image.shape
    assert C == 3, "expected RGB input"
    LANES = 128
    TILE = 8 * LANES                         # full (8,128) vreg tile
    HW = H * W
    HWp = ((HW + TILE - 1) // TILE) * TILE   # pad so S is a multiple of 8
    S = HWp // LANES

    x = image.reshape(B, 3, HW)
    if HWp != HW:
        # Zero padding is norm-safe: HSV(0,0,0) == (0,0,0), so pad elements add
        # nothing to the per-channel sum-of-squares and are sliced off below.
        x = jnp.pad(x, ((0, 0), (0, 0), (0, HWp - HW)))
    x = x.reshape(B, 3, S, LANES)

    # Generation-keyed VMEM sizing: 128 MiB on v5e/v6e, 64 MiB/TC on v7x.
    detected_vmem = _detect_vmem_capacity_bytes()
    vmem_cap = detected_vmem if detected_vmem is not None else 64 * 1024 * 1024
    vmem_limit = min(int(vmem_cap * 3) // 4, 100 * 1024 * 1024)
    block_budget = vmem_limit // 2

    # Images per grid step: double-buffered in+out blocks plus live f32
    # temporaries (post-stack-removal) stay within ~96 bytes per padded pixel.
    bytes_per_image = 96 * HWp
    bt_budget = max(1, block_budget // max(bytes_per_image, 1))
    # Keep the grid at >= ~4 steps whenever B allows so the pipeline reaches
    # steady state (per-step overhead is only ~0.35 us).
    target_steps = 4 if B >= 4 else B
    bt_cap = max(1, B // max(target_steps, 1))
    bt = max(1, min(B, bt_budget, bt_cap))
    num_steps = -(-B // bt)

    # v7x (64 MiB/TC, 2 TensorCores): split the batch grid across cores.
    dim_sem = ("parallel",)
    if (detected_vmem is not None and detected_vmem == 64 * 1024 * 1024
            and num_steps >= 2 and num_steps % 2 == 0):
        dim_sem = (pltpu.CORE_PARALLEL,)

    def _run(semantics):
        return pl.pallas_call(
            hsv_feature_kernel,
            out_shape=jax.ShapeDtypeStruct((B, 3, S, LANES), image.dtype),
            grid_spec=pltpu.PrefetchScalarGridSpec(
                num_scalar_prefetch=0,
                grid=(num_steps,),
                in_specs=[pl.BlockSpec((bt, 3, S, LANES), lambda i: (i, 0, 0, 0))],
                out_specs=pl.BlockSpec((bt, 3, S, LANES), lambda i: (i, 0, 0, 0)),
            ),
            compiler_params=pltpu.CompilerParams(
                dimension_semantics=semantics,
                vmem_limit_bytes=vmem_limit,
            ),
        )(x)

    try:
        hsv = _run(dim_sem)
    except Exception:
        if dim_sem == ("parallel",):
            raise
        hsv = _run(("parallel",))            # safe fallback if CORE_PARALLEL is rejected

    hsv = hsv.reshape(B, 3, HWp)
    if HWp != HW:
        hsv = hsv[:, :, :HW]
    hsv = hsv.reshape(B, 3, H, W)
    color = hsv[:, :2]
    brightness = hsv[:, 2:3]
    return color, brightness


def _reference(image):
    """Pure-JAX reference mirroring the PyTorch forward (eval mode)."""
    r, g, b = image[:, 0], image[:, 1], image[:, 2]
    mx = jnp.max(image, axis=1)
    mn = jnp.min(image, axis=1)
    diff = mx - mn
    v = mx
    s = jnp.where(mx > 0, diff / jnp.where(mx > 0, mx, 1.0), 0.0)
    sd = jnp.where(diff > 0, diff, 1.0)
    h = jnp.where((mx == r) & (diff > 0), jnp.mod((g - b) / sd, 6.0), 0.0)
    h = jnp.where((mx == g) & (diff > 0), (b - r) / sd + 2.0, h)
    h = jnp.where((mx == b) & (diff > 0), (r - g) / sd + 4.0, h)
    h = h / 6.0
    hsv = jnp.stack([h, s, v], axis=1)
    color = hsv[:, :2]
    brightness = hsv[:, 2:3]

    def l2norm(t):
        flat = t.reshape(t.shape[0], t.shape[1], -1)
        n = jnp.maximum(jnp.linalg.norm(flat, axis=2, keepdims=True), 1e-12)
        return (flat / n).reshape(t.shape)

    return l2norm(color), l2norm(brightness)


if __name__ == "__main__":
    key = jax.random.PRNGKey(0)
    B, C, H, W = 2, 3, 16, 16
    image = jax.random.uniform(key, (B, C, H, W), dtype=jnp.float32)

    color, brightness = augmented_feature_extractor(image)
    color = jax.block_until_ready(color)
    brightness = jax.block_until_ready(brightness)

    ref_color, ref_brightness = _reference(image)
    assert color.shape == (B, 2, H, W) and brightness.shape == (B, 1, H, W)
    assert jnp.allclose(color, ref_color, atol=1e-5, rtol=1e-5)
    assert jnp.allclose(brightness, ref_brightness, atol=1e-5, rtol=1e-5)

    print("KERNEL_OK")
</pallas_src>

<mosaic_0001>
module attributes {stable_mosaic.version = 11 : i64} {
  func.func @hsv_feature_kernel(%arg0: i32, %arg1: memref<1x3x8x128xf32, #tpu.memory_space<vmem>>, %arg2: memref<1x3x8x128xf32, #tpu.memory_space<vmem>>) attributes {dimension_semantics = [#tpu.dimension_semantics<parallel>], iteration_bounds = array<i64: 2>, scalar_prefetch = 0 : i64, scratch_operands = 0 : i64, tpu.core_type = #tpu.core_type<tc>, window_params = [{transform_indices = @transform_0, window_bounds = array<i64: 1, 3, 8, 128>}, {transform_indices = @transform_1, window_bounds = array<i64: 1, 3, 8, 128>}]} {
    %c0 = arith.constant 0 : index
    %c0_0 = arith.constant 0 : index
    %c0_1 = arith.constant 0 : index
    %c0_2 = arith.constant 0 : index
    %0 = vector.load %arg1[%c0, %c0_0, %c0_1, %c0_2] : memref<1x3x8x128xf32, #tpu.memory_space<vmem>>, vector<1x3x8x128xf32>
    %1 = vector.extract_strided_slice %0 {offsets = [0, 0, 0, 0], sizes = [1, 1, 8, 128], strides = [1, 1, 1, 1]} : vector<1x3x8x128xf32> to vector<1x1x8x128xf32>
    %2 = vector.shape_cast %1 : vector<1x1x8x128xf32> to vector<1x8x128xf32>
    %3 = vector.extract_strided_slice %0 {offsets = [0, 1, 0, 0], sizes = [1, 1, 8, 128], strides = [1, 1, 1, 1]} : vector<1x3x8x128xf32> to vector<1x1x8x128xf32>
    %4 = vector.shape_cast %3 : vector<1x1x8x128xf32> to vector<1x8x128xf32>
    %5 = vector.extract_strided_slice %0 {offsets = [0, 2, 0, 0], sizes = [1, 1, 8, 128], strides = [1, 1, 1, 1]} : vector<1x3x8x128xf32> to vector<1x1x8x128xf32>
    %6 = vector.shape_cast %5 : vector<1x1x8x128xf32> to vector<1x8x128xf32>
    %7 = arith.maximumf %2, %4 : vector<1x8x128xf32>
    %8 = arith.maximumf %7, %6 : vector<1x8x128xf32>
    %9 = arith.minimumf %2, %4 : vector<1x8x128xf32>
    %10 = arith.minimumf %9, %6 : vector<1x8x128xf32>
    %11 = arith.subf %8, %10 : vector<1x8x128xf32>
    %cst = arith.constant 1.000000e-30 : f32
    %12 = vector.broadcast %cst : f32 to vector<1x8x128xf32>
    %13 = arith.maximumf %8, %12 : vector<1x8x128xf32>
    %14 = tpu.reciprocal %13 : vector<1x8x128xf32> -> vector<1x8x128xf32>
    %15 = arith.mulf %11, %14 : vector<1x8x128xf32>
    %cst_3 = arith.constant 1.000000e-30 : f32
    %16 = vector.broadcast %cst_3 : f32 to vector<1x8x128xf32>
    %17 = arith.maximumf %11, %16 : vector<1x8x128xf32>
    %18 = tpu.reciprocal %17 : vector<1x8x128xf32> -> vector<1x8x128xf32>
    %19 = arith.subf %4, %6 : vector<1x8x128xf32>
    %20 = arith.mulf %19, %18 : vector<1x8x128xf32>
    %cst_4 = arith.constant 0.000000e+00 : f32
    %21 = vector.broadcast %cst_4 : f32 to vector<1x8x128xf32>
    %22 = arith.cmpf olt, %20, %21 : vector<1x8x128xf32>
    %cst_5 = arith.constant 6.000000e+00 : f32
    %23 = vector.broadcast %cst_5 : f32 to vector<1x8x128xf32>
    %24 = arith.addf %20, %23 : vector<1x8x128xf32>
    %25 = arith.select %22, %24, %20 : vector<1x8x128xi1>, vector<1x8x128xf32>
    %26 = arith.cmpf oeq, %8, %2 : vector<1x8x128xf32>
    %cst_6 = arith.constant 0.000000e+00 : f32
    %27 = vector.broadcast %cst_6 : f32 to vector<1x8x128xf32>
    %28 = arith.select %26, %25, %27 : vector<1x8x128xi1>, vector<1x8x128xf32>
    %29 = arith.cmpf oeq, %8, %4 : vector<1x8x128xf32>
    %30 = arith.subf %6, %2 : vector<1x8x128xf32>
    %31 = arith.mulf %30, %18 : vector<1x8x128xf32>
    %cst_7 = arith.constant 2.000000e+00 : f32
    %32 = vector.broadcast %cst_7 : f32 to vector<1x8x128xf32>
    %33 = arith.addf %31, %32 : vector<1x8x128xf32>
    %34 = arith.select %29, %33, %28 : vector<1x8x128xi1>, vector<1x8x128xf32>
    %35 = arith.cmpf oeq, %8, %6 : vector<1x8x128xf32>
    %36 = arith.subf %2, %4 : vector<1x8x128xf32>
    %37 = arith.mulf %36, %18 : vector<1x8x128xf32>
    %cst_8 = arith.constant 4.000000e+00 : f32
    %38 = vector.broadcast %cst_8 : f32 to vector<1x8x128xf32>
    %39 = arith.addf %37, %38 : vector<1x8x128xf32>
    %40 = arith.select %35, %39, %34 : vector<1x8x128xi1>, vector<1x8x128xf32>
    %cst_9 = arith.constant 0.000000e+00 : f32
    %41 = vector.broadcast %cst_9 : f32 to vector<1x8x128xf32>
    %42 = arith.cmpf ogt, %11, %41 : vector<1x8x128xf32>
    %cst_10 = arith.constant 0.000000e+00 : f32
    %43 = vector.broadcast %cst_10 : f32 to vector<1x8x128xf32>
    %44 = arith.select %42, %40, %43 : vector<1x8x128xi1>, vector<1x8x128xf32>
    %45 = arith.mulf %44, %44 : vector<1x8x128xf32>
    %cst_11 = arith.constant dense<0.000000e+00> : vector<1xf32>
    %46 = vector.multi_reduction <add>, %45, %cst_11 [1, 2] : vector<1x8x128xf32> to vector<1xf32>
    %47 = vector.shape_cast %46 : vector<1xf32> to vector<1x1x1xf32>
    %cst_12 = arith.constant 1.000000e-24 : f32
    %48 = vector.broadcast %cst_12 : f32 to vector<1x1x1xf32>
    %49 = arith.maximumf %47, %48 : vector<1x1x1xf32>
    %50 = math.rsqrt %49 : vector<1x1x1xf32>
    %51 = arith.mulf %15, %15 : vector<1x8x128xf32>
    %cst_13 = arith.constant dense<0.000000e+00> : vector<1xf32>
    %52 = vector.multi_reduction <add>, %51, %cst_13 [1, 2] : vector<1x8x128xf32> to vector<1xf32>
    %53 = vector.shape_cast %52 : vector<1xf32> to vector<1x1x1xf32>
    %cst_14 = arith.constant 1.000000e-24 : f32
    %54 = vector.broadcast %cst_14 : f32 to vector<1x1x1xf32>
    %55 = arith.maximumf %53, %54 : vector<1x1x1xf32>
    %56 = math.rsqrt %55 : vector<1x1x1xf32>
    %57 = arith.mulf %8, %8 : vector<1x8x128xf32>
    %cst_15 = arith.constant dense<0.000000e+00> : vector<1xf32>
    %58 = vector.multi_reduction <add>, %57, %cst_15 [1, 2] : vector<1x8x128xf32> to vector<1xf32>
    %59 = vector.shape_cast %58 : vector<1xf32> to vector<1x1x1xf32>
    %cst_16 = arith.constant 1.000000e-24 : f32
    %60 = vector.broadcast %cst_16 : f32 to vector<1x1x1xf32>
    %61 = arith.maximumf %59, %60 : vector<1x1x1xf32>
    %62 = math.rsqrt %61 : vector<1x1x1xf32>
    %63 = vector.broadcast %50 : vector<1x1x1xf32> to vector<1x8x128xf32>
    %64 = arith.mulf %44, %63 : vector<1x8x128xf32>
    %c0_17 = arith.constant 0 : index
    %c0_18 = arith.constant 0 : index
    %c0_19 = arith.constant 0 : index
    %c0_20 = arith.constant 0 : index
    %65 = vector.load %arg2[%c0_17, %c0_18, %c0_19, %c0_20] : memref<1x3x8x128xf32, #tpu.memory_space<vmem>>, vector<1x1x8x128xf32>
    %66 = vector.shape_cast %65 : vector<1x1x8x128xf32> to vector<1x8x128xf32>
    %67 = vector.shape_cast %64 : vector<1x8x128xf32> to vector<1x1x8x128xf32>
    tpu.vector_store %arg2[%c0_17, %c0_18, %c0_19, %c0_20], %67 {strides = array<i32>} : memref<1x3x8x128xf32, #tpu.memory_space<vmem>>, vector<1x1x8x128xf32>,
    %68 = vector.broadcast %56 : vector<1x1x1xf32> to vector<1x8x128xf32>
    %69 = arith.mulf %15, %68 : vector<1x8x128xf32>
    %c0_21 = arith.constant 0 : index
    %c1 = arith.constant 1 : index
    %c0_22 = arith.constant 0 : index
    %c0_23 = arith.constant 0 : index
    %70 = vector.load %arg2[%c0_21, %c1, %c0_22, %c0_23] : memref<1x3x8x128xf32, #tpu.memory_space<vmem>>, vector<1x1x8x128xf32>
    %71 = vector.shape_cast %70 : vector<1x1x8x128xf32> to vector<1x8x128xf32>
    %72 = vector.shape_cast %69 : vector<1x8x128xf32> to vector<1x1x8x128xf32>
    tpu.vector_store %arg2[%c0_21, %c1, %c0_22, %c0_23], %72 {strides = array<i32>} : memref<1x3x8x128xf32, #tpu.memory_space<vmem>>, vector<1x1x8x128xf32>,
    %73 = vector.broadcast %62 : vector<1x1x1xf32> to vector<1x8x128xf32>
    %74 = arith.mulf %8, %73 : vector<1x8x128xf32>
    %c0_24 = arith.constant 0 : index
    %c2 = arith.constant 2 : index
    %c0_25 = arith.constant 0 : index
    %c0_26 = arith.constant 0 : index
    %75 = vector.load %arg2[%c0_24, %c2, %c0_25, %c0_26] : memref<1x3x8x128xf32, #tpu.memory_space<vmem>>, vector<1x1x8x128xf32>
    %76 = vector.shape_cast %75 : vector<1x1x8x128xf32> to vector<1x8x128xf32>
    %77 = vector.shape_cast %74 : vector<1x8x128xf32> to vector<1x1x8x128xf32>
    tpu.vector_store %arg2[%c0_24, %c2, %c0_25, %c0_26], %77 {strides = array<i32>} : memref<1x3x8x128xf32, #tpu.memory_space<vmem>>, vector<1x1x8x128xf32>,
    return
  }
  func.func @transform_0(%arg0: i32) -> (i32, i32, i32, i32) {
    %c0_i32 = arith.constant 0 : i32
    %c0_i32_0 = arith.constant 0 : i32
    %c0_i32_1 = arith.constant 0 : i32
    %c0_i32_2 = arith.constant 0 : i32
    return %arg0, %c0_i32, %c0_i32_0, %c0_i32_1 : i32, i32, i32, i32
  }
  func.func @transform_1(%arg0: i32) -> (i32, i32, i32, i32) {
    %c0_i32 = arith.constant 0 : i32
    %c0_i32_0 = arith.constant 0 : i32
    %c0_i32_1 = arith.constant 0 : i32
    %c0_i32_2 = arith.constant 0 : i32
    return %arg0, %c0_i32, %c0_i32_0, %c0_i32_1 : i32, i32, i32, i32
  }
}

</mosaic_0001>

<llo_original>
// kernel: tpu_custom_call.1
$region0: #{tpu_custom_call.1}
  #allocation0 [shape = 'u32[]', space=smem, size = 0x4, offset = 0x4, fixed_abs, tag = 'smem constant byte address 0x4 - core index']
  #allocation1 [shape = 'u32[144,128]{1,0:T(1,128)}', space=vmem, size = 0x12000, scoped, tag = 'internal scratch']
  %s0 = inlined_call_operand.hbm [shape: f32[2,3,8,128], index: 0, kind: input, shape index: {}]
  %s1 = inlined_call_operand.hbm [shape: f32[2,3,8,128], index: 1, kind: output, shape index: {}]
  %s2 = sld [smem:[#allocation0]]
  $region41: #{tpu_custom_call.1} parent=0
    _
  %s4 = ssub.s32 1, %s2
  %s5 = scalar_select 0, %s4, %s2
  $region1: #{tpu_custom_call.1} parent=0
    #allocation2 [shape = 'u8[24576]{0}', space=vmem, size = 0x6000, scoped, tag = 'input window, operand 0']
    #allocation3 [shape = 's32[2]{0}', space=sflag, size = 0x8, scoped, tag = 'scoped memory for tpu_custom_call.1']
    #allocation4 [shape = 's32[2]{0}', space=sflag, size = 0x8, scoped, tag = 'scoped memory for tpu_custom_call.1']
    #allocation5 [shape = 'u8[24576]{0}', space=vmem, size = 0x6000, scoped, tag = 'output window, operand 0']
    %6 = vsyncpa [#allocation3], 0
    %s7 = scalar_lea.sflag [#allocation3], 1
    %8 = vsyncpa %s7, 0
    %9 = vsyncpa [#allocation4], 0
    %s10 = scalar_lea.sflag [#allocation4], 1
    %11 = vsyncpa %s10, 0
    loop: start=0, step=1, limit=4
    $region2: #{tpu_custom_call.1} parent=1 // loop_pre_header
      _
    $region3: #{tpu_custom_call.1} parent=1 // loop_header
      %s13 = sphi 0, %s17
      %p14 = scmp.ge.s32.totalorder %s13, 4
      %s23 = sphi 0, %s25
      %s26 = sphi 0, %s23
      %s27 = sphi 0, %s26
      %s43 = sphi 0, %s27
      %s49 = sphi 0, %s51
      %s52 = sphi 0, %s49
      %s53 = sphi 0, %s52
      %s69 = sphi 0, %s53
    $region4: #{tpu_custom_call.1} parent=1 // loop_header_branch
      %16 = sbr.rel (%p14) target = $region8
    $region5: #{tpu_custom_call.1} parent=1 // loop_body
      %s18 = ssub.s32 %s13, 1
      %s19 = ssub.s32 %s13, 2
      %s20 = sadd.s32 %s13, 1
      %s21 = ssub.s32 %s13, %s20
      %p22 = scmp.eq.s32.totalorder %s21, 0
      %s24 = sadd.s32 %s23, 1
      %s25 = scalar_select %p22, %s23, %s24
      %p28 = pneg %p22
      %p29 = scmp.eq.s32.totalorder %s13, 1
      %p30 = por %p28, %p29
      %p31 = scmp.ne.s32.totalorder %s23, %s26
      %p32 = scmp.eq.s32.totalorder %s13, 0
      %p33 = por %p31, %p32
      %p34 = scmp.ne.s32.totalorder %s23, %s26
      %p35 = scmp.eq.s32.totalorder %s18, 1
      %p36 = por %p34, %p35
      %p37 = scmp.ne.s32.totalorder %s26, %s27
      %p38 = scmp.eq.s32.totalorder %s18, 0
      %p39 = por %p37, %p38
      %p40 = scmp.ne.s32.totalorder %s26, %s27
      %p41 = scmp.eq.s32.totalorder %s19, 1
      %p42 = por %p40, %p41
      %p44 = scmp.ne.s32.totalorder %s27, %s43
      %p45 = scmp.eq.s32.totalorder %s19, 0
      %p46 = por %p44, %p45
      %s47 = ssub.s32 %s13, %s20
      %p48 = scmp.eq.s32.totalorder %s47, 0
      %s50 = sadd.s32 %s49, 1
      %s51 = scalar_select %p48, %s49, %s50
      %p54 = pneg %p48
      %p55 = scmp.eq.s32.totalorder %s13, 1
      %p56 = por %p54, %p55
      %p57 = scmp.ne.s32.totalorder %s49, %s52
      %p58 = scmp.eq.s32.totalorder %s13, 0
      %p59 = por %p57, %p58
      %p60 = scmp.ne.s32.totalorder %s49, %s52
      %p61 = scmp.eq.s32.totalorder %s18, 1
      %p62 = por %p60, %p61
      %p63 = scmp.ne.s32.totalorder %s52, %s53
      %p64 = scmp.eq.s32.totalorder %s18, 0
      %p65 = por %p63, %p64
      %p66 = scmp.ne.s32.totalorder %s52, %s53
      %p67 = scmp.eq.s32.totalorder %s19, 1
      %p68 = por %p66, %p67
      %p70 = scmp.ne.s32.totalorder %s53, %s69
      %p71 = scmp.eq.s32.totalorder %s19, 0
      %p72 = por %p70, %p71
      %p73 = scmp.le.s32.totalorder 1, %s13
      %p74 = scmp.lt.s32.totalorder %s13, 3
      %p75 = pnand %p73, %p74
      %p76 = pneg %p75
      // Predicated region
      $region9: #{tpu_custom_call.1} parent=5 // pred_check
        _
      $region10: #{tpu_custom_call.1} parent=5 // pred_check_branch
        %78 = sbr.rel (%p75) target = $region12
      $region11: #{tpu_custom_call.1} parent=5 // pred_region
        %s79 = ssub.s32 %s13, 1
      $region12: #{tpu_custom_call.1} parent=5 // pred_fallthru
        _
      %p80 = scmp.lt.s32.totalorder %s13, 2
      // Predicated region
      $region13: #{tpu_custom_call.1} parent=5 // pred_check
        %p81 = pneg %p80
      $region14: #{tpu_custom_call.1} parent=5 // pred_check_branch
        %83 = sbr.rel (%p81) target = $region16
      $region15: #{tpu_custom_call.1} parent=5 // pred_region
        // Predicated region
        $region17: #{tpu_custom_call.1} parent=15 // pred_check
          %p84 = pneg %p33
        $region18: #{tpu_custom_call.1} parent=15 // pred_check_branch
          %86 = sbr.rel (%p84) target = $region20
        $region19: #{tpu_custom_call.1} parent=15 // pred_region
          %s87 = sand.u32 %s23, 1
          %s88 = scalar_lea.sflag [#allocation3], %s87
          %s89 = sand.u32 %s23, 1
          %s90 = smul.addr %s89, 24
          %s91 = scalar_lea.vmem [#allocation2], %s90
          %s93 = ssub.s32 384, 384
          %94 = vsyncadd %s88, %s93
          %s95 = smul.addr %s13, 3
          %s96 = smul.addr %s95, 128
          %s97 = scalar_lea.hbm %s0, %s96
          %s98 = sshll.u32 %s91, 4
          %s99 = int_to_ptr.vmem [resolvable:$true] %s98
          %104 = dma.hbm_to_vmem [thread:$0]  %s97, 384, %s99, %s88, 128, 128, 8
        $region20: #{tpu_custom_call.1} parent=15 // pred_fallthru
          _
      $region16: #{tpu_custom_call.1} parent=5 // pred_fallthru
        _
      %p105 = scmp.le.s32.totalorder 1, %s13
      %p106 = scmp.lt.s32.totalorder %s13, 3
      %p107 = pnand %p105, %p106
      %p108 = pneg %p107
      // Predicated region
      $region21: #{tpu_custom_call.1} parent=5 // pred_check
        _
      $region22: #{tpu_custom_call.1} parent=5 // pred_check_branch
        %110 = sbr.rel (%p107) target = $region24
      $region23: #{tpu_custom_call.1} parent=5 // pred_region
        %s111 = ssub.s32 %s13, 1
        %s112 = sand.u32 %s26, 1
        %s113 = scalar_lea.sflag [#allocation3], %s112
        %s114 = sand.u32 %s26, 1
        %s115 = smul.addr %s114, 24
        %s116 = scalar_lea.vmem [#allocation2], %s115
        // Predicated region
        $region25: #{tpu_custom_call.1} parent=23 // pred_check
          %p117 = pneg %p39
        $region26: #{tpu_custom_call.1} parent=23 // pred_check_branch
          %119 = sbr.rel (%p117) target = $region28
        $region27: #{tpu_custom_call.1} parent=23 // pred_region
          %120 = dma.done %s113, 384
        $region28: #{tpu_custom_call.1} parent=23 // pred_fallthru
          _
        %s121 = sand.u32 %s26, 1
        %s122 = scalar_lea.sflag [#allocation3], %s121
        %s123 = sand.u32 %s26, 1
        %s124 = smul.addr %s123, 24
        %s125 = scalar_lea.vmem [#allocation2], %s124
        %p126 = pneg %p39
        %p127 = pneg %p36
        %p128 = pneg %p65
        %p129 = pneg %p62
        %s130 = sand.u32 %s52, 1
        %s131 = scalar_lea.sflag [#allocation4], %s130
        %s132 = sand.u32 %s52, 1
        %s133 = smul.addr %s132, 24
        %s134 = scalar_lea.vmem [#allocation5], %s133
        %v135 = vld [vmem:[%s116] sm:$0xff]
        %v136 = vld [vmem:[%s116 + $0x8] sm:$0xff]
        %v137 = vld [vmem:[%s116 + $0x10] sm:$0xff]
        %v138 = vmax.f32 %v135, %v136
        %v139 = vmax.f32 %v138, %v137
        %v140 = vmin.f32 %v135, %v136
        %v141 = vmin.f32 %v140, %v137
        %v142 = vsub.f32 %v139, %v141
        %v143 = vmax.f32 %v139, 1e-30
        %v144 = vrcp.pop %v143
        %v145 = vmul.f32 %v142, %v144
        %v146 = vmax.f32 %v142, 1e-30
        %v147 = vrcp.pop %v146
        %v148 = vsub.f32 %v136, %v137
        %v149 = vmul.f32 %v148, %v147
        %vm150 = vcmp.lt.f32.partialorder %v149, 0.0
        %v151 = vadd.f32 %v149, 6.0
        %v152 = vsel %vm150, %v151, %v149
        %vm153 = vcmp.eq.f32.partialorder %v139, %v135
        %v154 = vsel %vm153, %v152, 0.0
        %vm155 = vcmp.eq.f32.partialorder %v139, %v136
        %v156 = vsub.f32 %v137, %v135
        %v157 = vmul.f32 %v156, %v147
        %v158 = vadd.f32 %v157, 2.0
        %v159 = vsel %vm155, %v158, %v154
        %vm160 = vcmp.eq.f32.partialorder %v139, %v137
        %v161 = vsub.f32 %v135, %v136
        %v162 = vmul.f32 %v161, %v147
        %v163 = vadd.f32 %v162, 4.0
        %v164 = vsel %vm160, %v163, %v159
        %vm165 = vcmp.gt.f32.partialorder %v142, 0.0
        %v166 = vsel %vm165, %v164, 0.0
        %v167 = vmul.f32 %v166, %v166
        %168 = vadd.xlane.f32.xlu0 %v167
        %v169 = vpop.xlane.xlu0 %168
        %v170 = vrot.slane %v169, 4
        %v171 = vadd.f32 %v169, %v170
        %v172 = vrot.slane %v171, 2
        %v173 = vadd.f32 %v171, %v172
        %v174 = vrot.slane %v173, 1
        %v175 = vadd.f32 %v173, %v174
        %v176 = vmax.f32 %v175, 1e-24
        %v177 = vrsqrt.pop %v176
        %v178 = vmul.f32 %v145, %v145
        %179 = vadd.xlane.f32.xlu0 %v178
        %v180 = vpop.xlane.xlu0 %179
        %v181 = vrot.slane %v180, 4
        %v182 = vadd.f32 %v180, %v181
        %v183 = vrot.slane %v182, 2
        %v184 = vadd.f32 %v182, %v183
        %v185 = vrot.slane %v184, 1
        %v186 = vadd.f32 %v184, %v185
        %v187 = vmax.f32 %v186, 1e-24
        %v188 = vrsqrt.pop %v187
        %v189 = vmul.f32 %v139, %v139
        %190 = vadd.xlane.f32.xlu0 %v189
        %v191 = vpop.xlane.xlu0 %190
        %v192 = vrot.slane %v191, 4
        %v193 = vadd.f32 %v191, %v192
        %v194 = vrot.slane %v193, 2
        %v195 = vadd.f32 %v193, %v194
        %v196 = vrot.slane %v195, 1
        %v197 = vadd.f32 %v195, %v196
        %v198 = vmax.f32 %v197, 1e-24
        %v199 = vrsqrt.pop %v198
        %v200 = vmul.f32 %v166, %v177
        %201 = vst [vmem:[%s134] sm:$0xff] %v200
        %v202 = vmul.f32 %v145, %v188
        %s203 = scalar_lea.vmem %s134, 8 [#allocation5]
        %204 = vst [vmem:[%s203] sm:$0xff] %v202
        %v205 = vmul.f32 %v139, %v199
        %s206 = scalar_lea.vmem %s134, 16 [#allocation5]
        %207 = vst [vmem:[%s206] sm:$0xff] %v205
        %s208 = sand.u32 %s52, 1
        %s209 = scalar_lea.sflag [#allocation4], %s208
        %s210 = sand.u32 %s52, 1
        %s211 = smul.addr %s210, 24
        %s212 = scalar_lea.vmem [#allocation5], %s211
        // Predicated region
        $region29: #{tpu_custom_call.1} parent=23 // pred_check
          %p213 = pneg %p62
        $region30: #{tpu_custom_call.1} parent=23 // pred_check_branch
          %215 = sbr.rel (%p213) target = $region32
        $region31: #{tpu_custom_call.1} parent=23 // pred_region
          %s217 = ssub.s32 384, 384
          %218 = vsyncadd %s209, %s217
          %s219 = smul.addr %s18, 3
          %s220 = smul.addr %s219, 128
          %s221 = scalar_lea.hbm %s1, %s220
          %s222 = sshll.u32 %s212, 4
          %s223 = int_to_ptr.vmem [resolvable:$true] %s222
          %228 = dma.vmem_to_hbm [thread:$0]  %s223, 384, %s221, %s209, 128, 128, 8
        $region32: #{tpu_custom_call.1} parent=23 // pred_fallthru
          _
      $region24: #{tpu_custom_call.1} parent=5 // pred_fallthru
        _
      %p229 = scmp.le.s32.totalorder 2, %s13
      // Predicated region
      $region33: #{tpu_custom_call.1} parent=5 // pred_check
        %p230 = pneg %p229
      $region34: #{tpu_custom_call.1} parent=5 // pred_check_branch
        %232 = sbr.rel (%p230) target = $region36
      $region35: #{tpu_custom_call.1} parent=5 // pred_region
        %s233 = ssub.s32 %s13, 2
        // Predicated region
        $region37: #{tpu_custom_call.1} parent=35 // pred_check
          %p234 = pneg %p68
        $region38: #{tpu_custom_call.1} parent=35 // pred_check_branch
          %236 = sbr.rel (%p234) target = $region40
        $region39: #{tpu_custom_call.1} parent=35 // pred_region
          %s237 = sand.u32 %s53, 1
          %s238 = scalar_lea.sflag [#allocation4], %s237
          %s239 = sand.u32 %s53, 1
          %s240 = smul.addr %s239, 24
          %s241 = scalar_lea.vmem [#allocation5], %s240
          %242 = dma.done %s238, 384
        $region40: #{tpu_custom_call.1} parent=35 // pred_fallthru
          _
      $region36: #{tpu_custom_call.1} parent=5 // pred_fallthru
        _
    $region6: #{tpu_custom_call.1} parent=1 // loop_footer
      %s17 = sadd.s32 1, %s13
    $region7: #{tpu_custom_call.1} parent=1 // loop_footer_branch
      %12 = sbr.rel target = $region3
    $region8: #{tpu_custom_call.1} parent=1 // loop_exit
      _
    %243 = vsyncpa [#allocation3], 1
    %s244 = scalar_lea.sflag [#allocation3], 1
    %245 = vsyncpa %s244, 1
    %246 = vsyncpa [#allocation4], 1
    %s247 = scalar_lea.sflag [#allocation4], 1
    %248 = vsyncpa %s247, 1

</llo_original>
